<compile_context>
chip_gen: v6e
topology: v6e:2x2x1
jax: 0.10.0
libtpu: 0.0.40
codegen_flags: <defaults>
</compile_context>

<pallas_src>
import jax
import jax.numpy as jnp
from jax.experimental import pallas as pl
from jax.experimental.pallas import tpu as pltpu

_LANE = 128      # lane width (last dim)
_SUBLANE = 16    # bf16 sublane packing (second-to-last dim)


def _round_up(n, m):
    return ((n + m - 1) // m) * m


def _mlp_kernel(x_ref, w1_ref, b1_ref, w2_ref, b2_ref, w3_ref, b3_ref, o_ref):
    # Layer 1: Linear -> ReLU  (Dropout == identity, eval-mode)
    h = jnp.dot(x_ref[...], w1_ref[...], preferred_element_type=jnp.float32)
    h = jnp.maximum(h + b1_ref[...], 0.0)

    # Layer 2: Linear -> ReLU  (Dropout == identity)
    h = jnp.dot(h.astype(w2_ref.dtype), w2_ref[...],
                preferred_element_type=jnp.float32)
    h = jnp.maximum(h + b2_ref[...], 0.0)

    # Output layer: Linear (no activation)
    o = jnp.dot(h.astype(w3_ref.dtype), w3_ref[...],
                preferred_element_type=jnp.float32)
    o_ref[...] = (o + b3_ref[...]).astype(o_ref.dtype)


def _prepare_params(params):
    """Pad every layer to lane-multiple widths and cast weights to bf16.

    Weights stay [in, out] (== PyTorch weight.T); biases stay [1, out] fp32.
    Zero padding keeps the math exact: padded input columns hit zero weight
    rows, padded output columns get 0 + 0-bias and are sliced off afterwards.
    """
    padded = {}
    n_layers = len(params) // 2
    for i in range(1, n_layers + 1):
        w = params[f"w{i}"]
        b = params[f"b{i}"]
        in_p = _round_up(w.shape[0], _LANE)
        out_p = _round_up(w.shape[1], _LANE)
        padded[f"w{i}"] = jnp.pad(
            w, ((0, in_p - w.shape[0]), (0, out_p - w.shape[1]))
        ).astype(jnp.bfloat16)
        padded[f"b{i}"] = jnp.pad(
            b, ((0, 0), (0, out_p - b.shape[1]))
        ).astype(jnp.float32)
    return padded


@jax.jit
def encoder_net_forward(x, params):
    """Fused EncoderNet forward.

    x:      [B, input_dim]  float32
    params: dict with w1 [in,h1], b1 [1,h1], w2 [h1,h2], b2 [1,h2],
                      w3 [h2,out], b3 [1,out]   (all float32)
    """
    B, in_dim = x.shape
    out_dim = params["w3"].shape[1]

    pp = _prepare_params(params)
    in_p, h1_p = pp["w1"].shape
    h2_p = pp["w2"].shape[1]
    out_p = pp["w3"].shape[1]

    # Batch tile: as large as practical (review suggests 512-1024 rows for
    # these widths), multiple of the bf16 sublane pack; keep a single grid axis.
    tile_b = min(512, _round_up(B, _SUBLANE))
    b_pad = _round_up(B, tile_b)
    grid = (b_pad // tile_b,)

    x_p = jnp.pad(x, ((0, b_pad - B), (0, in_p - in_dim))).astype(jnp.bfloat16)

    # Conservative VMEM budget: double-buffered x/out tiles + (double-buffered)
    # resident weights + fp32 activations, 2x headroom, clamped under the
    # 64 MiB/TC available on v7x (fine on v5e/v6e's 128 MiB too).
    io_bytes = 2 * tile_b * (in_p * 2 + out_p * 4)
    w_bytes = 2 * 2 * (in_p * h1_p + h1_p * h2_p + h2_p * out_p)
    act_bytes = 4 * tile_b * max(h1_p, h2_p, out_p)
    vmem_limit = int(min(max(2 * (io_bytes + w_bytes + act_bytes), 32 << 20),
                         48 << 20))

    flops = 2 * b_pad * (in_p * h1_p + h1_p * h2_p + h2_p * out_p)
    bytes_accessed = (x_p.size * 2
                      + sum(int(v.size) * v.dtype.itemsize for v in pp.values())
                      + b_pad * out_p * 4)

    out_padded = pl.pallas_call(
        _mlp_kernel,
        out_shape=jax.ShapeDtypeStruct((b_pad, out_p), jnp.float32),
        grid=grid,
        in_specs=[
            pl.BlockSpec((tile_b, in_p), lambda i: (i, 0)),   # x tile (pipelined)
            pl.BlockSpec((in_p, h1_p), lambda i: (0, 0)),     # weights: VMEM-resident
            pl.BlockSpec((1, h1_p), lambda i: (0, 0)),
            pl.BlockSpec((h1_p, h2_p), lambda i: (0, 0)),
            pl.BlockSpec((1, h2_p), lambda i: (0, 0)),
            pl.BlockSpec((h2_p, out_p), lambda i: (0, 0)),
            pl.BlockSpec((1, out_p), lambda i: (0, 0)),
        ],
        out_specs=pl.BlockSpec((tile_b, out_p), lambda i: (i, 0)),
        compiler_params=pltpu.CompilerParams(
            dimension_semantics=("parallel",),
            vmem_limit_bytes=vmem_limit,
        ),
        cost_estimate=pl.CostEstimate(
            flops=flops, transcendentals=0, bytes_accessed=bytes_accessed),
    )(x_p, pp["w1"], pp["b1"], pp["w2"], pp["b2"], pp["w3"], pp["b3"])

    return out_padded[:B, :out_dim]


def init_params(key, input_dim, hidden_dims, output_dim):
    """Deterministic synthetic parameters (same shapes nn.Linear would have)."""
    dims = [input_dim] + list(hidden_dims) + [output_dim]
    params = {}
    for i in range(len(dims) - 1):
        key, kw, kb = jax.random.split(key, 3)
        bound = 1.0 / jnp.sqrt(dims[i])
        # stored as [in, out]  (== PyTorch weight.T)
        params[f"w{i+1}"] = jax.random.uniform(
            kw, (dims[i], dims[i + 1]), jnp.float32, -bound, bound)
        params[f"b{i+1}"] = jax.random.uniform(
            kb, (1, dims[i + 1]), jnp.float32, -bound, bound)
    return params


def reference_forward(x, params):
    """Pure-JAX reference with the same bf16 weight/activation quantization
    as the kernel's MXU path (fp32 accumulation)."""
    q = lambda a: a.astype(jnp.bfloat16).astype(jnp.float32)
    h = jnp.maximum(q(x) @ q(params["w1"]) + params["b1"], 0.0)
    h = jnp.maximum(q(h) @ q(params["w2"]) + params["b2"], 0.0)
    return q(h) @ q(params["w3"]) + params["b3"]


if __name__ == "__main__":
    input_dim, hidden_dims, output_dim = 32, [64, 64], 16
    batch = 8

    key = jax.random.PRNGKey(0)
    key, kx = jax.random.split(key)
    x = jax.random.normal(kx, (batch, input_dim), jnp.float32)
    params = init_params(key, input_dim, hidden_dims, output_dim)

    out = encoder_net_forward(x, params)
    out = jax.block_until_ready(out)

    ref = reference_forward(x, params)
    assert out.shape == (batch, output_dim)
    assert jnp.allclose(out, ref, atol=1e-3, rtol=1e-3), "mismatch vs reference"

    print("KERNEL_OK")
</pallas_src>

<mosaic_0001>
module attributes {stable_mosaic.version = 11 : i64} {
  func.func @_mlp_kernel(%arg0: i32, %arg1: memref<16x128xbf16, #tpu.memory_space<vmem>>, %arg2: memref<128x128xbf16, #tpu.memory_space<vmem>>, %arg3: memref<1x128xf32, #tpu.memory_space<vmem>>, %arg4: memref<128x128xbf16, #tpu.memory_space<vmem>>, %arg5: memref<1x128xf32, #tpu.memory_space<vmem>>, %arg6: memref<128x128xbf16, #tpu.memory_space<vmem>>, %arg7: memref<1x128xf32, #tpu.memory_space<vmem>>, %arg8: memref<16x128xf32, #tpu.memory_space<vmem>>) attributes {dimension_semantics = [#tpu.dimension_semantics<parallel>], iteration_bounds = array<i64: 1>, scalar_prefetch = 0 : i64, scratch_operands = 0 : i64, tpu.core_type = #tpu.core_type<tc>, window_params = [{transform_indices = @transform_0, window_bounds = array<i64: 16, 128>}, {pipeline_mode = #tpu.pipeline_mode<synchronous>, transform_indices = @transform_1, window_bounds = array<i64: 128, 128>}, {pipeline_mode = #tpu.pipeline_mode<synchronous>, transform_indices = @transform_2, window_bounds = array<i64: 1, 128>}, {pipeline_mode = #tpu.pipeline_mode<synchronous>, transform_indices = @transform_3, window_bounds = array<i64: 128, 128>}, {pipeline_mode = #tpu.pipeline_mode<synchronous>, transform_indices = @transform_4, window_bounds = array<i64: 1, 128>}, {pipeline_mode = #tpu.pipeline_mode<synchronous>, transform_indices = @transform_5, window_bounds = array<i64: 128, 128>}, {pipeline_mode = #tpu.pipeline_mode<synchronous>, transform_indices = @transform_6, window_bounds = array<i64: 1, 128>}, {transform_indices = @transform_7, window_bounds = array<i64: 16, 128>}]} {
    %c0 = arith.constant 0 : index
    %c0_0 = arith.constant 0 : index
    %0 = vector.load %arg1[%c0, %c0_0] : memref<16x128xbf16, #tpu.memory_space<vmem>>, vector<16x128xbf16>
    %c0_1 = arith.constant 0 : index
    %c0_2 = arith.constant 0 : index
    %1 = vector.load %arg2[%c0_1, %c0_2] : memref<128x128xbf16, #tpu.memory_space<vmem>>, vector<128x128xbf16>
    %cst = arith.constant dense<0.000000e+00> : vector<16x128xf32>
    %2 = tpu.matmul %0, %1, %cst {dimension_numbers = #tpu.dot_dimension_numbers<[1], [0], [0], [1], [0, 0, 1, 1], [], []>} : vector<16x128xbf16>, vector<128x128xbf16>, vector<16x128xf32> -> vector<16x128xf32>
    %c0_3 = arith.constant 0 : index
    %c0_4 = arith.constant 0 : index
    %3 = vector.load %arg3[%c0_3, %c0_4] : memref<1x128xf32, #tpu.memory_space<vmem>>, vector<1x128xf32>
    %4 = vector.broadcast %3 : vector<1x128xf32> to vector<16x128xf32>
    %5 = arith.addf %2, %4 : vector<16x128xf32>
    %cst_5 = arith.constant 0.000000e+00 : f32
    %6 = vector.broadcast %cst_5 : f32 to vector<16x128xf32>
    %7 = arith.maximumf %5, %6 : vector<16x128xf32>
    %8 = arith.truncf %7 : vector<16x128xf32> to vector<16x128xbf16>
    %c0_6 = arith.constant 0 : index
    %c0_7 = arith.constant 0 : index
    %9 = vector.load %arg4[%c0_6, %c0_7] : memref<128x128xbf16, #tpu.memory_space<vmem>>, vector<128x128xbf16>
    %cst_8 = arith.constant dense<0.000000e+00> : vector<16x128xf32>
    %10 = tpu.matmul %8, %9, %cst_8 {dimension_numbers = #tpu.dot_dimension_numbers<[1], [0], [0], [1], [0, 0, 1, 1], [], []>} : vector<16x128xbf16>, vector<128x128xbf16>, vector<16x128xf32> -> vector<16x128xf32>
    %c0_9 = arith.constant 0 : index
    %c0_10 = arith.constant 0 : index
    %11 = vector.load %arg5[%c0_9, %c0_10] : memref<1x128xf32, #tpu.memory_space<vmem>>, vector<1x128xf32>
    %12 = vector.broadcast %11 : vector<1x128xf32> to vector<16x128xf32>
    %13 = arith.addf %10, %12 : vector<16x128xf32>
    %cst_11 = arith.constant 0.000000e+00 : f32
    %14 = vector.broadcast %cst_11 : f32 to vector<16x128xf32>
    %15 = arith.maximumf %13, %14 : vector<16x128xf32>
    %16 = arith.truncf %15 : vector<16x128xf32> to vector<16x128xbf16>
    %c0_12 = arith.constant 0 : index
    %c0_13 = arith.constant 0 : index
    %17 = vector.load %arg6[%c0_12, %c0_13] : memref<128x128xbf16, #tpu.memory_space<vmem>>, vector<128x128xbf16>
    %cst_14 = arith.constant dense<0.000000e+00> : vector<16x128xf32>
    %18 = tpu.matmul %16, %17, %cst_14 {dimension_numbers = #tpu.dot_dimension_numbers<[1], [0], [0], [1], [0, 0, 1, 1], [], []>} : vector<16x128xbf16>, vector<128x128xbf16>, vector<16x128xf32> -> vector<16x128xf32>
    %c0_15 = arith.constant 0 : index
    %c0_16 = arith.constant 0 : index
    %19 = vector.load %arg7[%c0_15, %c0_16] : memref<1x128xf32, #tpu.memory_space<vmem>>, vector<1x128xf32>
    %20 = vector.broadcast %19 : vector<1x128xf32> to vector<16x128xf32>
    %21 = arith.addf %18, %20 : vector<16x128xf32>
    %c0_17 = arith.constant 0 : index
    %c0_18 = arith.constant 0 : index
    %22 = vector.load %arg8[%c0_17, %c0_18] : memref<16x128xf32, #tpu.memory_space<vmem>>, vector<16x128xf32>
    tpu.vector_store %arg8[%c0_17, %c0_18], %21 {strides = array<i32>} : memref<16x128xf32, #tpu.memory_space<vmem>>, vector<16x128xf32>,
    return
  }
  func.func @transform_0(%arg0: i32) -> (i32, i32) {
    %c0_i32 = arith.constant 0 : i32
    %c0_i32_0 = arith.constant 0 : i32
    return %arg0, %c0_i32 : i32, i32
  }
  func.func @transform_1(%arg0: i32) -> (i32, i32) {
    %c0_i32 = arith.constant 0 : i32
    %c0_i32_0 = arith.constant 0 : i32
    %c0_i32_1 = arith.constant 0 : i32
    return %c0_i32, %c0_i32_0 : i32, i32
  }
  func.func @transform_2(%arg0: i32) -> (i32, i32) {
    %c0_i32 = arith.constant 0 : i32
    %c0_i32_0 = arith.constant 0 : i32
    %c0_i32_1 = arith.constant 0 : i32
    return %c0_i32, %c0_i32_0 : i32, i32
  }
  func.func @transform_3(%arg0: i32) -> (i32, i32) {
    %c0_i32 = arith.constant 0 : i32
    %c0_i32_0 = arith.constant 0 : i32
    %c0_i32_1 = arith.constant 0 : i32
    return %c0_i32, %c0_i32_0 : i32, i32
  }
  func.func @transform_4(%arg0: i32) -> (i32, i32) {
    %c0_i32 = arith.constant 0 : i32
    %c0_i32_0 = arith.constant 0 : i32
    %c0_i32_1 = arith.constant 0 : i32
    return %c0_i32, %c0_i32_0 : i32, i32
  }
  func.func @transform_5(%arg0: i32) -> (i32, i32) {
    %c0_i32 = arith.constant 0 : i32
    %c0_i32_0 = arith.constant 0 : i32
    %c0_i32_1 = arith.constant 0 : i32
    return %c0_i32, %c0_i32_0 : i32, i32
  }
  func.func @transform_6(%arg0: i32) -> (i32, i32) {
    %c0_i32 = arith.constant 0 : i32
    %c0_i32_0 = arith.constant 0 : i32
    %c0_i32_1 = arith.constant 0 : i32
    return %c0_i32, %c0_i32_0 : i32, i32
  }
  func.func @transform_7(%arg0: i32) -> (i32, i32) {
    %c0_i32 = arith.constant 0 : i32
    %c0_i32_0 = arith.constant 0 : i32
    return %arg0, %c0_i32 : i32, i32
  }
}

</mosaic_0001>

<llo_original>
// kernel: encoder_net_forward.1
$region0: #{encoder_net_forward.1}
  #allocation0 [shape = 'u32[]', space=smem, size = 0x4, offset = 0x4, fixed_abs, tag = 'smem constant byte address 0x4 - core index']
  #allocation1 [shape = 'u32[144,128]{1,0:T(1,128)}', space=vmem, size = 0x12000, scoped, tag = 'internal scratch']
  %s0 = inlined_call_operand.vmem [shape: bf16[16,128], index: 0, kind: input, shape index: {}]
  %s1 = inlined_call_operand.vmem [shape: bf16[128,128], index: 1, kind: input, shape index: {}]
  %s2 = inlined_call_operand.vmem [shape: f32[1,128], index: 2, kind: input, shape index: {}]
  %s3 = inlined_call_operand.vmem [shape: bf16[128,128], index: 3, kind: input, shape index: {}]
  %s4 = inlined_call_operand.vmem [shape: f32[1,128], index: 4, kind: input, shape index: {}]
  %s5 = inlined_call_operand.vmem [shape: bf16[128,128], index: 5, kind: input, shape index: {}]
  %s6 = inlined_call_operand.vmem [shape: f32[1,128], index: 6, kind: input, shape index: {}]
  %s7 = inlined_call_operand.vmem [shape: f32[16,128], index: 7, kind: output, shape index: {}]
  %s8 = sld [smem:[#allocation0]]
  $region38: #{encoder_net_forward.1} parent=0
    _
  %s10 = ssub.s32 1, %s8
  %s11 = scalar_select 0, %s10, %s8
  // Predicated region
  $region2: #{encoder_net_forward.1} parent=0 // pred_check
    _
  $region3: #{encoder_net_forward.1} parent=0 // pred_check_branch
    %13 = sbr.rel (0) target = $region5
  $region4: #{encoder_net_forward.1} parent=0 // pred_region
    _
  $region5: #{encoder_net_forward.1} parent=0 // pred_fallthru
    _
  // Predicated region
  $region6: #{encoder_net_forward.1} parent=0 // pred_check
    _
  $region7: #{encoder_net_forward.1} parent=0 // pred_check_branch
    %15 = sbr.rel (0) target = $region9
  $region8: #{encoder_net_forward.1} parent=0 // pred_region
    _
  $region9: #{encoder_net_forward.1} parent=0 // pred_fallthru
    _
  // Predicated region
  $region10: #{encoder_net_forward.1} parent=0 // pred_check
    _
  $region11: #{encoder_net_forward.1} parent=0 // pred_check_branch
    %17 = sbr.rel (0) target = $region13
  $region12: #{encoder_net_forward.1} parent=0 // pred_region
    _
  $region13: #{encoder_net_forward.1} parent=0 // pred_fallthru
    _
  // Predicated region
  $region14: #{encoder_net_forward.1} parent=0 // pred_check
    _
  $region15: #{encoder_net_forward.1} parent=0 // pred_check_branch
    %19 = sbr.rel (0) target = $region17
  $region16: #{encoder_net_forward.1} parent=0 // pred_region
    _
  $region17: #{encoder_net_forward.1} parent=0 // pred_fallthru
    _
  // Predicated region
  $region18: #{encoder_net_forward.1} parent=0 // pred_check
    _
  $region19: #{encoder_net_forward.1} parent=0 // pred_check_branch
    %21 = sbr.rel (0) target = $region21
  $region20: #{encoder_net_forward.1} parent=0 // pred_region
    _
  $region21: #{encoder_net_forward.1} parent=0 // pred_fallthru
    _
  // Predicated region
  $region22: #{encoder_net_forward.1} parent=0 // pred_check
    _
  $region23: #{encoder_net_forward.1} parent=0 // pred_check_branch
    %23 = sbr.rel (0) target = $region25
  $region24: #{encoder_net_forward.1} parent=0 // pred_region
    _
  $region25: #{encoder_net_forward.1} parent=0 // pred_fallthru
    _
  // Predicated region
  $region26: #{encoder_net_forward.1} parent=0 // pred_check
    _
  $region27: #{encoder_net_forward.1} parent=0 // pred_check_branch
    %25 = sbr.rel (0) target = $region29
  $region28: #{encoder_net_forward.1} parent=0 // pred_region
    _
  $region29: #{encoder_net_forward.1} parent=0 // pred_fallthru
    _
  %v27 = vld [vmem:[%s0] sm:$0xf]
  %v28 = vld [vmem:[%s0 + $0x4] sm:$0xf]
  %v29 = vld [vmem:[%s1] sm:$0xf]
  %v30 = vld [vmem:[%s1 + $0x4] sm:$0xf]
  %v31 = vld [vmem:[%s1 + $0x8] sm:$0xf]
  %v32 = vld [vmem:[%s1 + $0xc] sm:$0xf]
  %v33 = vld [vmem:[%s1 + $0x10] sm:$0xf]
  %v34 = vld [vmem:[%s1 + $0x14] sm:$0xf]
  %v35 = vld [vmem:[%s1 + $0x18] sm:$0xf]
  %v36 = vld [vmem:[%s1 + $0x1c] sm:$0xf]
  %v37 = vld [vmem:[%s1 + $0x20] sm:$0xf]
  %v38 = vld [vmem:[%s1 + $0x24] sm:$0xf]
  %v39 = vld [vmem:[%s1 + $0x28] sm:$0xf]
  %v40 = vld [vmem:[%s1 + $0x2c] sm:$0xf]
  %v41 = vld [vmem:[%s1 + $0x30] sm:$0xf]
  %v42 = vld [vmem:[%s1 + $0x34] sm:$0xf]
  %v43 = vld [vmem:[%s1 + $0x38] sm:$0xf]
  %v44 = vld [vmem:[%s1 + $0x3c] sm:$0xf]
  %v45 = vld [vmem:[%s2] sm:$0x1]
  %v47 = vlaneseq
  %v48 = vshrl.u32 %v47, 7
  %v49 = vsub.s32 0, %v48
  %v50 = vrot.slane %v45, %v49
  %v54 = vunpack.c.l.b16 %v27
  %v55 = vunpack.c.l.b16 %v28
  %v56 = vpack.c.b16 %v55, %v54
  %v74 = vunpack.c.l.b16 %v29
  %v75 = vunpack.c.l.b16 %v30
  %v76 = vunpack.c.l.b16 %v31
  %v77 = vunpack.c.l.b16 %v32
  %v78 = vunpack.c.l.b16 %v33
  %v79 = vunpack.c.l.b16 %v34
  %v80 = vunpack.c.l.b16 %v35
  %v81 = vunpack.c.l.b16 %v36
  %v82 = vunpack.c.l.b16 %v37
  %v83 = vunpack.c.l.b16 %v38
  %v84 = vunpack.c.l.b16 %v39
  %v85 = vunpack.c.l.b16 %v40
  %v86 = vunpack.c.l.b16 %v41
  %v87 = vunpack.c.l.b16 %v42
  %v88 = vunpack.c.l.b16 %v43
  %v89 = vunpack.c.l.b16 %v44
  %v90 = vpack.c.b16 %v75, %v74
  %v91 = vpack.c.b16 %v77, %v76
  %v92 = vpack.c.b16 %v79, %v78
  %v93 = vpack.c.b16 %v81, %v80
  %v94 = vpack.c.b16 %v83, %v82
  %v95 = vpack.c.b16 %v85, %v84
  %v96 = vpack.c.b16 %v87, %v86
  %v97 = vpack.c.b16 %v89, %v88
  %106 = vmatprep.subr.bf16.mxu0 0
  %107 = vmatpush1.bf16.msra.mxu0 %v97
  %108 = vmatprep.subr.bf16.mxu0 0
  %109 = vmatpush1.bf16.msra.mxu0 %v96
  %110 = vmatprep.subr.bf16.mxu0 0
  %111 = vmatpush1.bf16.msra.mxu0 %v95
  %112 = vmatprep.subr.bf16.mxu0 0
  %113 = vmatpush1.bf16.msra.mxu0 %v94
  %114 = vmatprep.subr.bf16.mxu0 0
  %115 = vmatpush1.bf16.msra.mxu0 %v93
  %116 = vmatprep.subr.bf16.mxu0 0
  %117 = vmatpush1.bf16.msra.mxu0 %v92
  %118 = vmatprep.subr.bf16.mxu0 0
  %119 = vmatpush1.bf16.msra.mxu0 %v91
  %120 = vmatprep.subr.bf16.mxu0 0
  %121 = vmatpush1.bf16.msra.mxu0 %v90
  %122 = vmatprep.subr.bf16.mxu0 0
  %123 = vmatpush2.bf16.msra.mxu0 0
  %124 = vmatprep.subr.bf16.mxu0 0
  %125 = vmatpush2.bf16.msra.mxu0 0
  %126 = vmatprep.subr.bf16.mxu0 0
  %127 = vmatpush2.bf16.msra.mxu0 0
  %128 = vmatprep.subr.bf16.mxu0 0
  %129 = vmatpush2.bf16.msra.mxu0 0
  %130 = vmatprep.subr.bf16.mxu0 0
  %131 = vmatpush2.bf16.msra.mxu0 0
  %132 = vmatprep.subr.bf16.mxu0 0
  %133 = vmatpush2.bf16.msra.mxu0 0
  %134 = vmatprep.subr.bf16.mxu0 0
  %135 = vmatpush2.bf16.msra.mxu0 0
  %136 = vmatprep.subr.bf16.mxu0 0
  %137 = vmatpush2.bf16.msra.mxu0 0
  %138 = vmatprep.mubr.bf16.mxu0 0
  %139 = vmatmul.mubr.bf16.gmra.mxu0 %v56
  %v140 = vpop.f32.mrf.mxu0
  %v141 = vadd.f32 %v50, %v140
  %v142 = vpop.f32.mrf.mxu0
  %v143 = vpop.f32.mrf.mxu0
  %v144 = vadd.f32 %v50, %v143
  %v145 = vpop.f32.mrf.mxu0
  %146 = vdwg.mxu0
  %v147 = vmax.f32 %v141, 0.0
  %v148 = vmax.f32 %v144, 0.0
  %v149 = vpack.c.bf16 %v148, %v147
  %v150 = vld [vmem:[%s3] sm:$0xf]
  %v151 = vld [vmem:[%s3 + $0x4] sm:$0xf]
  %v152 = vld [vmem:[%s3 + $0x8] sm:$0xf]
  %v153 = vld [vmem:[%s3 + $0xc] sm:$0xf]
  %v154 = vld [vmem:[%s3 + $0x10] sm:$0xf]
  %v155 = vld [vmem:[%s3 + $0x14] sm:$0xf]
  %v156 = vld [vmem:[%s3 + $0x18] sm:$0xf]
  %v157 = vld [vmem:[%s3 + $0x1c] sm:$0xf]
  %v158 = vld [vmem:[%s3 + $0x20] sm:$0xf]
  %v159 = vld [vmem:[%s3 + $0x24] sm:$0xf]
  %v160 = vld [vmem:[%s3 + $0x28] sm:$0xf]
  %v161 = vld [vmem:[%s3 + $0x2c] sm:$0xf]
  %v162 = vld [vmem:[%s3 + $0x30] sm:$0xf]
  %v163 = vld [vmem:[%s3 + $0x34] sm:$0xf]
  %v164 = vld [vmem:[%s3 + $0x38] sm:$0xf]
  %v165 = vld [vmem:[%s3 + $0x3c] sm:$0xf]
  %v166 = vld [vmem:[%s4] sm:$0x1]
  %v168 = vlaneseq
  %v169 = vshrl.u32 %v168, 7
  %v170 = vsub.s32 0, %v169
  %v171 = vrot.slane %v166, %v170
  %v189 = vunpack.c.l.b16 %v150
  %v190 = vunpack.c.l.b16 %v151
  %v191 = vunpack.c.l.b16 %v152
  %v192 = vunpack.c.l.b16 %v153
  %v193 = vunpack.c.l.b16 %v154
  %v194 = vunpack.c.l.b16 %v155
  %v195 = vunpack.c.l.b16 %v156
  %v196 = vunpack.c.l.b16 %v157
  %v197 = vunpack.c.l.b16 %v158
  %v198 = vunpack.c.l.b16 %v159
  %v199 = vunpack.c.l.b16 %v160
  %v200 = vunpack.c.l.b16 %v161
  %v201 = vunpack.c.l.b16 %v162
  %v202 = vunpack.c.l.b16 %v163
  %v203 = vunpack.c.l.b16 %v164
  %v204 = vunpack.c.l.b16 %v165
  %v205 = vpack.c.b16 %v190, %v189
  %v206 = vpack.c.b16 %v192, %v191
  %v207 = vpack.c.b16 %v194, %v193
  %v208 = vpack.c.b16 %v196, %v195
  %v209 = vpack.c.b16 %v198, %v197
  %v210 = vpack.c.b16 %v200, %v199
  %v211 = vpack.c.b16 %v202, %v201
  %v212 = vpack.c.b16 %v204, %v203
  %221 = vmatprep.subr.bf16.mxu0 0
  %222 = vmatpush1.bf16.msra.mxu0 %v212
  %223 = vmatprep.subr.bf16.mxu0 0
  %224 = vmatpush1.bf16.msra.mxu0 %v211
  %225 = vmatprep.subr.bf16.mxu0 0
  %226 = vmatpush1.bf16.msra.mxu0 %v210
  %227 = vmatprep.subr.bf16.mxu0 0
  %228 = vmatpush1.bf16.msra.mxu0 %v209
  %229 = vmatprep.subr.bf16.mxu0 0
  %230 = vmatpush1.bf16.msra.mxu0 %v208
  %231 = vmatprep.subr.bf16.mxu0 0
  %232 = vmatpush1.bf16.msra.mxu0 %v207
  %233 = vmatprep.subr.bf16.mxu0 0
  %234 = vmatpush1.bf16.msra.mxu0 %v206
  %235 = vmatprep.subr.bf16.mxu0 0
  %236 = vmatpush1.bf16.msra.mxu0 %v205
  %237 = vmatprep.subr.bf16.mxu0 0
  %238 = vmatpush2.bf16.msra.mxu0 0
  %239 = vmatprep.subr.bf16.mxu0 0
  %240 = vmatpush2.bf16.msra.mxu0 0
  %241 = vmatprep.subr.bf16.mxu0 0
  %242 = vmatpush2.bf16.msra.mxu0 0
  %243 = vmatprep.subr.bf16.mxu0 0
  %244 = vmatpush2.bf16.msra.mxu0 0
  %245 = vmatprep.subr.bf16.mxu0 0
  %246 = vmatpush2.bf16.msra.mxu0 0
  %247 = vmatprep.subr.bf16.mxu0 0
  %248 = vmatpush2.bf16.msra.mxu0 0
  %249 = vmatprep.subr.bf16.mxu0 0
  %250 = vmatpush2.bf16.msra.mxu0 0
  %251 = vmatprep.subr.bf16.mxu0 0
  %252 = vmatpush2.bf16.msra.mxu0 0
  %253 = vmatprep.mubr.bf16.mxu0 0
  %254 = vmatmul.mubr.bf16.gmra.mxu0 %v149
  %v255 = vpop.f32.mrf.mxu0
  %v256 = vadd.f32 %v171, %v255
  %v257 = vpop.f32.mrf.mxu0
  %v258 = vpop.f32.mrf.mxu0
  %v259 = vadd.f32 %v171, %v258
  %v260 = vpop.f32.mrf.mxu0
  %261 = vdwg.mxu0
  %v262 = vmax.f32 %v256, 0.0
  %v263 = vmax.f32 %v259, 0.0
  %v264 = vpack.c.bf16 %v263, %v262
  %v265 = vld [vmem:[%s5] sm:$0xf]
  %v266 = vld [vmem:[%s5 + $0x4] sm:$0xf]
  %v267 = vld [vmem:[%s5 + $0x8] sm:$0xf]
  %v268 = vld [vmem:[%s5 + $0xc] sm:$0xf]
  %v269 = vld [vmem:[%s5 + $0x10] sm:$0xf]
  %v270 = vld [vmem:[%s5 + $0x14] sm:$0xf]
  %v271 = vld [vmem:[%s5 + $0x18] sm:$0xf]
  %v272 = vld [vmem:[%s5 + $0x1c] sm:$0xf]
  %v273 = vld [vmem:[%s5 + $0x20] sm:$0xf]
  %v274 = vld [vmem:[%s5 + $0x24] sm:$0xf]
  %v275 = vld [vmem:[%s5 + $0x28] sm:$0xf]
  %v276 = vld [vmem:[%s5 + $0x2c] sm:$0xf]
  %v277 = vld [vmem:[%s5 + $0x30] sm:$0xf]
  %v278 = vld [vmem:[%s5 + $0x34] sm:$0xf]
  %v279 = vld [vmem:[%s5 + $0x38] sm:$0xf]
  %v280 = vld [vmem:[%s5 + $0x3c] sm:$0xf]
  %v281 = vld [vmem:[%s6] sm:$0x1]
  %v283 = vlaneseq
  %v284 = vshrl.u32 %v283, 7
  %v285 = vsub.s32 0, %v284
  %v286 = vrot.slane %v281, %v285
  %v304 = vunpack.c.l.b16 %v265
  %v305 = vunpack.c.l.b16 %v266
  %v306 = vunpack.c.l.b16 %v267
  %v307 = vunpack.c.l.b16 %v268
  %v308 = vunpack.c.l.b16 %v269
  %v309 = vunpack.c.l.b16 %v270
  %v310 = vunpack.c.l.b16 %v271
  %v311 = vunpack.c.l.b16 %v272
  %v312 = vunpack.c.l.b16 %v273
  %v313 = vunpack.c.l.b16 %v274
  %v314 = vunpack.c.l.b16 %v275
  %v315 = vunpack.c.l.b16 %v276
  %v316 = vunpack.c.l.b16 %v277
  %v317 = vunpack.c.l.b16 %v278
  %v318 = vunpack.c.l.b16 %v279
  %v319 = vunpack.c.l.b16 %v280
  %v320 = vpack.c.b16 %v305, %v304
  %v321 = vpack.c.b16 %v307, %v306
  %v322 = vpack.c.b16 %v309, %v308
  %v323 = vpack.c.b16 %v311, %v310
  %v324 = vpack.c.b16 %v313, %v312
  %v325 = vpack.c.b16 %v315, %v314
  %v326 = vpack.c.b16 %v317, %v316
  %v327 = vpack.c.b16 %v319, %v318
  %336 = vmatprep.subr.bf16.mxu0 0
  %337 = vmatpush1.bf16.msra.mxu0 %v327
  %338 = vmatprep.subr.bf16.mxu0 0
  %339 = vmatpush1.bf16.msra.mxu0 %v326
  %340 = vmatprep.subr.bf16.mxu0 0
  %341 = vmatpush1.bf16.msra.mxu0 %v325
  %342 = vmatprep.subr.bf16.mxu0 0
  %343 = vmatpush1.bf16.msra.mxu0 %v324
  %344 = vmatprep.subr.bf16.mxu0 0
  %345 = vmatpush1.bf16.msra.mxu0 %v323
  %346 = vmatprep.subr.bf16.mxu0 0
  %347 = vmatpush1.bf16.msra.mxu0 %v322
  %348 = vmatprep.subr.bf16.mxu0 0
  %349 = vmatpush1.bf16.msra.mxu0 %v321
  %350 = vmatprep.subr.bf16.mxu0 0
  %351 = vmatpush1.bf16.msra.mxu0 %v320
  %352 = vmatprep.subr.bf16.mxu0 0
  %353 = vmatpush2.bf16.msra.mxu0 0
  %354 = vmatprep.subr.bf16.mxu0 0
  %355 = vmatpush2.bf16.msra.mxu0 0
  %356 = vmatprep.subr.bf16.mxu0 0
  %357 = vmatpush2.bf16.msra.mxu0 0
  %358 = vmatprep.subr.bf16.mxu0 0
  %359 = vmatpush2.bf16.msra.mxu0 0
  %360 = vmatprep.subr.bf16.mxu0 0
  %361 = vmatpush2.bf16.msra.mxu0 0
  %362 = vmatprep.subr.bf16.mxu0 0
  %363 = vmatpush2.bf16.msra.mxu0 0
  %364 = vmatprep.subr.bf16.mxu0 0
  %365 = vmatpush2.bf16.msra.mxu0 0
  %366 = vmatprep.subr.bf16.mxu0 0
  %367 = vmatpush2.bf16.msra.mxu0 0
  %368 = vmatprep.mubr.bf16.mxu0 0
  %369 = vmatmul.mubr.bf16.gmra.mxu0 %v264
  %v370 = vpop.f32.mrf.mxu0
  %v371 = vadd.f32 %v286, %v370
  %v372 = vpop.f32.mrf.mxu0
  %v373 = vpop.f32.mrf.mxu0
  %v374 = vadd.f32 %v286, %v373
  %v375 = vpop.f32.mrf.mxu0
  %376 = vdwg.mxu0
  %377 = vst [vmem:[%s7] sm:$0xff] %v371
  %378 = vst [vmem:[%s7 + $0x8] sm:$0xff] %v374
  // Predicated region
  $region30: #{encoder_net_forward.1} parent=0 // pred_check
    _
  $region31: #{encoder_net_forward.1} parent=0 // pred_check_branch
    %380 = sbr.rel (0) target = $region33
  $region32: #{encoder_net_forward.1} parent=0 // pred_region
    _
  $region33: #{encoder_net_forward.1} parent=0 // pred_fallthru
    _
  // Predicated region
  $region34: #{encoder_net_forward.1} parent=0 // pred_check
    _
  $region35: #{encoder_net_forward.1} parent=0 // pred_check_branch
    %382 = sbr.rel (0) target = $region37
  $region36: #{encoder_net_forward.1} parent=0 // pred_region
    _
  $region37: #{encoder_net_forward.1} parent=0 // pred_fallthru
    _

</llo_original>
